<compile_context>
chip_gen: v7x
topology: tpu7x:2x2x1
jax: 0.10.0
libtpu: 0.0.40
codegen_flags: <defaults>
</compile_context>

<pallas_src>
import functools

import jax
import jax.numpy as jnp
from jax.experimental import pallas as pl
from jax.experimental.pallas import tpu as pltpu


def _loss_reduce_kernel(x_ref, t_ref, w_ref, acc_ref, *, rows_mult8):
    # x/t/w blocks: (1, TR, 128).  acc block: (1, 4, 8, 128), resident across
    # the reduction axis (same block index for every k) -> accumulator.
    k = pl.program_id(1)

    @pl.when(k == 0)
    def _():
        acc_ref[...] = jnp.zeros_like(acc_ref)

    x = x_ref[0].astype(jnp.float32)   # (TR, 128) logits
    t = t_ref[0].astype(jnp.float32)   # (TR, 128) targets
    w = w_ref[0].astype(jnp.float32)   # (TR, 128) weights

    # Numerically stable log-sigmoid pair: 3 EUP transcendentals per element
    # (exp, log, exp) instead of 4 (sigmoid + two logs).
    e = jnp.exp(-jnp.abs(x))
    softplus_nabs = jnp.log(1.0 + e)                  # log(1 + exp(-|x|))
    log_o = jnp.minimum(x, 0.0) - softplus_nabs       # log(sigmoid(x))
    log_1mo = jnp.minimum(-x, 0.0) - softplus_nabs    # log(1 - sigmoid(x))
    o = jnp.exp(log_o)                                # sigmoid(x)

    # F.binary_cross_entropy clamps each log term at -100 (PyTorch semantics).
    bce = -(t * jnp.maximum(log_o, -100.0)
            + (1.0 - t) * jnp.maximum(log_1mo, -100.0))

    def partial_sum(v):
        if rows_mult8:
            tr = v.shape[0]
            # Pure-VPU add tree over whole (8,128) vregs; no cross-lane XLU work.
            return v.reshape(tr // 8, 8, 128).sum(axis=0)   # (8, 128)
        return jnp.sum(v, axis=0, keepdims=True)            # (1, 128)

    if rows_mult8:
        acc_ref[0, 0] += partial_sum(o * t)               # intersection
        acc_ref[0, 1] += partial_sum(o)                   # sum(sigmoid(output))
        acc_ref[0, 2] += partial_sum(t)                   # sum(target)
        acc_ref[0, 3] += partial_sum((w + 1.0) * bce)     # weighted BCE sum
    else:
        acc_ref[0, 0, 0:1, :] += partial_sum(o * t)
        acc_ref[0, 1, 0:1, :] += partial_sum(o)
        acc_ref[0, 2, 0:1, :] += partial_sum(t)
        acc_ref[0, 3, 0:1, :] += partial_sum((w + 1.0) * bce)


def _pick_tile_rows(R, max_rows=1024):
    """Largest TR <= max_rows that divides R; multiple of 8 whenever possible."""
    if R % 8 != 0:
        return R                      # rare shapes: single whole-image step
    m = R // 8
    g = min(m, max_rows // 8)
    while m % g != 0:
        g -= 1
    return 8 * g


def weighted_unet_loss_exact(output, target, weights):
    """Matches WeightedUnetLossExact.forward(output, target, weights)."""
    B = output.shape[0]
    N = output.size // B
    assert N % 128 == 0, "flattened per-image size must be a multiple of 128"
    # TODO(synk): shapes with C*H*W % 128 != 0 need zero-padded pixels with the
    # padded BCE/weight contribution masked out; not handled here.
    R = N // 128

    TR = _pick_tile_rows(R)
    rows_mult8 = (TR % 8 == 0)
    KT = R // TR

    x = output.reshape(B, R, 128)
    t = target.reshape(B, R, 128)
    w = weights.reshape(B, R, 128)

    in_spec = pl.BlockSpec((1, TR, 128), lambda b, k: (b, k, 0))
    out_spec = pl.BlockSpec((1, 4, 8, 128), lambda b, k: (b, 0, 0, 0))

    partials = pl.pallas_call(
        functools.partial(_loss_reduce_kernel, rows_mult8=rows_mult8),
        out_shape=jax.ShapeDtypeStruct((B, 4, 8, 128), jnp.float32),
        grid=(B, KT),
        in_specs=[in_spec, in_spec, in_spec],
        out_specs=out_spec,
        compiler_params=pltpu.CompilerParams(
            dimension_semantics=("parallel", "arbitrary")),
    )(x, t, w)

    # Tiny finalization in JAX: fold the lane-dense per-image partials.
    sums = jnp.sum(partials, axis=(2, 3))          # (B, 4)
    inter, osum, tsum, wbce = (sums[:, i] for i in range(4))

    dice_per_image = 2.0 * inter / (osum + tsum)
    dice_batch_loss = 1.0 - jnp.sum(dice_per_image) / B
    weighted_entropy_loss = jnp.sum(wbce) / (B * N)
    return dice_batch_loss + 0.5 * weighted_entropy_loss


def _reference(output, target, weights):
    """Pure-JAX reference mirroring the PyTorch module."""
    B = output.shape[0]
    o = jax.nn.sigmoid(output).reshape(B, -1).astype(jnp.float32)
    t = target.reshape(B, -1).astype(jnp.float32)
    w = weights.reshape(B, -1).astype(jnp.float32) + 1.0
    inter = jnp.sum(o * t, axis=1)
    dice = 2.0 * inter / (jnp.sum(o, axis=1) + jnp.sum(t, axis=1))
    dice_loss = 1.0 - jnp.sum(dice) / B
    bce = -(t * jnp.maximum(jnp.log(o), -100.0)
            + (1.0 - t) * jnp.maximum(jnp.log(1.0 - o), -100.0))
    return dice_loss + 0.5 * jnp.mean(w * bce)


if __name__ == "__main__":
    # Small shapes consistent with a segmentation head: (B, C, H, W)
    B, C, H, W = 2, 4, 16, 16
    key = jax.random.PRNGKey(0)
    k1, k2, k3 = jax.random.split(key, 3)

    output = jax.random.normal(k1, (B, C, H, W), dtype=jnp.float32)            # logits
    target = jax.random.bernoulli(k2, 0.3, (B, C, H, W)).astype(jnp.float32)   # 0/1 mask
    weights = jax.random.uniform(k3, (B, C, H, W), dtype=jnp.float32) * 5.0    # pixel weights

    loss = weighted_unet_loss_exact(output, target, weights)
    loss = jax.block_until_ready(loss)

    ref = jax.block_until_ready(_reference(output, target, weights))
    assert jnp.allclose(loss, ref, rtol=1e-5, atol=1e-5), (loss, ref)

    print("KERNEL_OK")
</pallas_src>

<mosaic_0001>
module attributes {stable_mosaic.version = 11 : i64} {
  func.func @_loss_reduce_kernel(%arg0: i32, %arg1: i32, %arg2: memref<1x8x128xf32, #tpu.memory_space<vmem>>, %arg3: memref<1x8x128xf32, #tpu.memory_space<vmem>>, %arg4: memref<1x8x128xf32, #tpu.memory_space<vmem>>, %arg5: memref<1x4x8x128xf32, #tpu.memory_space<vmem>>) attributes {dimension_semantics = [#tpu.dimension_semantics<parallel>, #tpu.dimension_semantics<arbitrary>], iteration_bounds = array<i64: 2, 1>, scalar_prefetch = 0 : i64, scratch_operands = 0 : i64, tpu.core_type = #tpu.core_type<tc>, window_params = [{transform_indices = @transform_0, window_bounds = array<i64: 1, 8, 128>}, {transform_indices = @transform_1, window_bounds = array<i64: 1, 8, 128>}, {transform_indices = @transform_2, window_bounds = array<i64: 1, 8, 128>}, {transform_indices = @transform_3, window_bounds = array<i64: 1, 4, 8, 128>}]} {
    %c0_i32 = arith.constant 0 : i32
    %0 = arith.cmpi eq, %arg1, %c0_i32 : i32
    %1 = arith.extui %0 : i1 to i32
    %c0_i32_0 = arith.constant 0 : i32
    %2 = arith.cmpi ne, %1, %c0_i32_0 : i32
    scf.if %2 {
      %cst_51 = arith.constant 0.000000e+00 : f32
      %72 = vector.broadcast %cst_51 : f32 to vector<1x4x8x128xf32>
      %c0_52 = arith.constant 0 : index
      %c0_53 = arith.constant 0 : index
      %c0_54 = arith.constant 0 : index
      %c0_55 = arith.constant 0 : index
      %73 = vector.load %arg5[%c0_52, %c0_53, %c0_54, %c0_55] : memref<1x4x8x128xf32, #tpu.memory_space<vmem>>, vector<1x4x8x128xf32>
      tpu.vector_store %arg5[%c0_52, %c0_53, %c0_54, %c0_55], %72 {strides = array<i32>} : memref<1x4x8x128xf32, #tpu.memory_space<vmem>>, vector<1x4x8x128xf32>,
    } else {
    }
    %c0 = arith.constant 0 : index
    %c0_1 = arith.constant 0 : index
    %c0_2 = arith.constant 0 : index
    %3 = vector.load %arg2[%c0, %c0_1, %c0_2] : memref<1x8x128xf32, #tpu.memory_space<vmem>>, vector<1x8x128xf32>
    %4 = vector.shape_cast %3 : vector<1x8x128xf32> to vector<8x128xf32>
    %c0_3 = arith.constant 0 : index
    %c0_4 = arith.constant 0 : index
    %c0_5 = arith.constant 0 : index
    %5 = vector.load %arg3[%c0_3, %c0_4, %c0_5] : memref<1x8x128xf32, #tpu.memory_space<vmem>>, vector<1x8x128xf32>
    %6 = vector.shape_cast %5 : vector<1x8x128xf32> to vector<8x128xf32>
    %c0_6 = arith.constant 0 : index
    %c0_7 = arith.constant 0 : index
    %c0_8 = arith.constant 0 : index
    %7 = vector.load %arg4[%c0_6, %c0_7, %c0_8] : memref<1x8x128xf32, #tpu.memory_space<vmem>>, vector<1x8x128xf32>
    %8 = vector.shape_cast %7 : vector<1x8x128xf32> to vector<8x128xf32>
    %9 = math.absf %4 : vector<8x128xf32>
    %cst = arith.constant 0.000000e+00 : f32
    %10 = vector.broadcast %cst : f32 to vector<8x128xf32>
    %11 = arith.subf %10, %9 : vector<8x128xf32>
    %12 = math.exp %11 : vector<8x128xf32>
    %cst_9 = arith.constant 1.000000e+00 : f32
    %13 = vector.broadcast %cst_9 : f32 to vector<8x128xf32>
    %14 = arith.addf %13, %12 : vector<8x128xf32>
    %15 = math.log %14 : vector<8x128xf32>
    %cst_10 = arith.constant 0.000000e+00 : f32
    %16 = vector.broadcast %cst_10 : f32 to vector<8x128xf32>
    %17 = arith.minimumf %4, %16 : vector<8x128xf32>
    %18 = arith.subf %17, %15 : vector<8x128xf32>
    %cst_11 = arith.constant 0.000000e+00 : f32
    %19 = vector.broadcast %cst_11 : f32 to vector<8x128xf32>
    %20 = arith.subf %19, %4 : vector<8x128xf32>
    %cst_12 = arith.constant 0.000000e+00 : f32
    %21 = vector.broadcast %cst_12 : f32 to vector<8x128xf32>
    %22 = arith.minimumf %20, %21 : vector<8x128xf32>
    %23 = arith.subf %22, %15 : vector<8x128xf32>
    %24 = math.exp %18 : vector<8x128xf32>
    %cst_13 = arith.constant -1.000000e+02 : f32
    %25 = vector.broadcast %cst_13 : f32 to vector<8x128xf32>
    %26 = arith.maximumf %18, %25 : vector<8x128xf32>
    %27 = arith.mulf %6, %26 : vector<8x128xf32>
    %cst_14 = arith.constant 1.000000e+00 : f32
    %28 = vector.broadcast %cst_14 : f32 to vector<8x128xf32>
    %29 = arith.subf %28, %6 : vector<8x128xf32>
    %cst_15 = arith.constant -1.000000e+02 : f32
    %30 = vector.broadcast %cst_15 : f32 to vector<8x128xf32>
    %31 = arith.maximumf %23, %30 : vector<8x128xf32>
    %32 = arith.mulf %29, %31 : vector<8x128xf32>
    %33 = arith.addf %27, %32 : vector<8x128xf32>
    %cst_16 = arith.constant 0.000000e+00 : f32
    %34 = vector.broadcast %cst_16 : f32 to vector<8x128xf32>
    %35 = arith.subf %34, %33 : vector<8x128xf32>
    %c0_17 = arith.constant 0 : index
    %c0_18 = arith.constant 0 : index
    %c0_19 = arith.constant 0 : index
    %c0_20 = arith.constant 0 : index
    %36 = vector.load %arg5[%c0_17, %c0_18, %c0_19, %c0_20] : memref<1x4x8x128xf32, #tpu.memory_space<vmem>>, vector<1x1x8x128xf32>
    %37 = vector.shape_cast %36 : vector<1x1x8x128xf32> to vector<8x128xf32>
    %38 = arith.mulf %24, %6 : vector<8x128xf32>
    %39 = vector.shape_cast %38 : vector<8x128xf32> to vector<1x8x128xf32>
    %cst_21 = arith.constant dense<0.000000e+00> : vector<8x128xf32>
    %40 = vector.multi_reduction <add>, %39, %cst_21 [0] : vector<1x8x128xf32> to vector<8x128xf32>
    %41 = arith.addf %37, %40 : vector<8x128xf32>
    %c0_22 = arith.constant 0 : index
    %c0_23 = arith.constant 0 : index
    %c0_24 = arith.constant 0 : index
    %c0_25 = arith.constant 0 : index
    %42 = vector.load %arg5[%c0_22, %c0_23, %c0_24, %c0_25] : memref<1x4x8x128xf32, #tpu.memory_space<vmem>>, vector<1x1x8x128xf32>
    %43 = vector.shape_cast %42 : vector<1x1x8x128xf32> to vector<8x128xf32>
    %44 = vector.shape_cast %41 : vector<8x128xf32> to vector<1x1x8x128xf32>
    tpu.vector_store %arg5[%c0_22, %c0_23, %c0_24, %c0_25], %44 {strides = array<i32>} : memref<1x4x8x128xf32, #tpu.memory_space<vmem>>, vector<1x1x8x128xf32>,
    %c0_26 = arith.constant 0 : index
    %c1 = arith.constant 1 : index
    %c0_27 = arith.constant 0 : index
    %c0_28 = arith.constant 0 : index
    %45 = vector.load %arg5[%c0_26, %c1, %c0_27, %c0_28] : memref<1x4x8x128xf32, #tpu.memory_space<vmem>>, vector<1x1x8x128xf32>
    %46 = vector.shape_cast %45 : vector<1x1x8x128xf32> to vector<8x128xf32>
    %47 = vector.shape_cast %24 : vector<8x128xf32> to vector<1x8x128xf32>
    %cst_29 = arith.constant dense<0.000000e+00> : vector<8x128xf32>
    %48 = vector.multi_reduction <add>, %47, %cst_29 [0] : vector<1x8x128xf32> to vector<8x128xf32>
    %49 = arith.addf %46, %48 : vector<8x128xf32>
    %c0_30 = arith.constant 0 : index
    %c1_31 = arith.constant 1 : index
    %c0_32 = arith.constant 0 : index
    %c0_33 = arith.constant 0 : index
    %50 = vector.load %arg5[%c0_30, %c1_31, %c0_32, %c0_33] : memref<1x4x8x128xf32, #tpu.memory_space<vmem>>, vector<1x1x8x128xf32>
    %51 = vector.shape_cast %50 : vector<1x1x8x128xf32> to vector<8x128xf32>
    %52 = vector.shape_cast %49 : vector<8x128xf32> to vector<1x1x8x128xf32>
    tpu.vector_store %arg5[%c0_30, %c1_31, %c0_32, %c0_33], %52 {strides = array<i32>} : memref<1x4x8x128xf32, #tpu.memory_space<vmem>>, vector<1x1x8x128xf32>,
    %c0_34 = arith.constant 0 : index
    %c2 = arith.constant 2 : index
    %c0_35 = arith.constant 0 : index
    %c0_36 = arith.constant 0 : index
    %53 = vector.load %arg5[%c0_34, %c2, %c0_35, %c0_36] : memref<1x4x8x128xf32, #tpu.memory_space<vmem>>, vector<1x1x8x128xf32>
    %54 = vector.shape_cast %53 : vector<1x1x8x128xf32> to vector<8x128xf32>
    %55 = vector.shape_cast %6 : vector<8x128xf32> to vector<1x8x128xf32>
    %cst_37 = arith.constant dense<0.000000e+00> : vector<8x128xf32>
    %56 = vector.multi_reduction <add>, %55, %cst_37 [0] : vector<1x8x128xf32> to vector<8x128xf32>
    %57 = arith.addf %54, %56 : vector<8x128xf32>
    %c0_38 = arith.constant 0 : index
    %c2_39 = arith.constant 2 : index
    %c0_40 = arith.constant 0 : index
    %c0_41 = arith.constant 0 : index
    %58 = vector.load %arg5[%c0_38, %c2_39, %c0_40, %c0_41] : memref<1x4x8x128xf32, #tpu.memory_space<vmem>>, vector<1x1x8x128xf32>
    %59 = vector.shape_cast %58 : vector<1x1x8x128xf32> to vector<8x128xf32>
    %60 = vector.shape_cast %57 : vector<8x128xf32> to vector<1x1x8x128xf32>
    tpu.vector_store %arg5[%c0_38, %c2_39, %c0_40, %c0_41], %60 {strides = array<i32>} : memref<1x4x8x128xf32, #tpu.memory_space<vmem>>, vector<1x1x8x128xf32>,
    %c0_42 = arith.constant 0 : index
    %c3 = arith.constant 3 : index
    %c0_43 = arith.constant 0 : index
    %c0_44 = arith.constant 0 : index
    %61 = vector.load %arg5[%c0_42, %c3, %c0_43, %c0_44] : memref<1x4x8x128xf32, #tpu.memory_space<vmem>>, vector<1x1x8x128xf32>
    %62 = vector.shape_cast %61 : vector<1x1x8x128xf32> to vector<8x128xf32>
    %cst_45 = arith.constant 1.000000e+00 : f32
    %63 = vector.broadcast %cst_45 : f32 to vector<8x128xf32>
    %64 = arith.addf %8, %63 : vector<8x128xf32>
    %65 = arith.mulf %64, %35 : vector<8x128xf32>
    %66 = vector.shape_cast %65 : vector<8x128xf32> to vector<1x8x128xf32>
    %cst_46 = arith.constant dense<0.000000e+00> : vector<8x128xf32>
    %67 = vector.multi_reduction <add>, %66, %cst_46 [0] : vector<1x8x128xf32> to vector<8x128xf32>
    %68 = arith.addf %62, %67 : vector<8x128xf32>
    %c0_47 = arith.constant 0 : index
    %c3_48 = arith.constant 3 : index
    %c0_49 = arith.constant 0 : index
    %c0_50 = arith.constant 0 : index
    %69 = vector.load %arg5[%c0_47, %c3_48, %c0_49, %c0_50] : memref<1x4x8x128xf32, #tpu.memory_space<vmem>>, vector<1x1x8x128xf32>
    %70 = vector.shape_cast %69 : vector<1x1x8x128xf32> to vector<8x128xf32>
    %71 = vector.shape_cast %68 : vector<8x128xf32> to vector<1x1x8x128xf32>
    tpu.vector_store %arg5[%c0_47, %c3_48, %c0_49, %c0_50], %71 {strides = array<i32>} : memref<1x4x8x128xf32, #tpu.memory_space<vmem>>, vector<1x1x8x128xf32>,
    return
  }
  func.func @transform_0(%arg0: i32, %arg1: i32) -> (i32, i32, i32) {
    %c0_i32 = arith.constant 0 : i32
    %c0_i32_0 = arith.constant 0 : i32
    return %arg0, %arg1, %c0_i32 : i32, i32, i32
  }
  func.func @transform_1(%arg0: i32, %arg1: i32) -> (i32, i32, i32) {
    %c0_i32 = arith.constant 0 : i32
    %c0_i32_0 = arith.constant 0 : i32
    return %arg0, %arg1, %c0_i32 : i32, i32, i32
  }
  func.func @transform_2(%arg0: i32, %arg1: i32) -> (i32, i32, i32) {
    %c0_i32 = arith.constant 0 : i32
    %c0_i32_0 = arith.constant 0 : i32
    return %arg0, %arg1, %c0_i32 : i32, i32, i32
  }
  func.func @transform_3(%arg0: i32, %arg1: i32) -> (i32, i32, i32, i32) {
    %c0_i32 = arith.constant 0 : i32
    %c0_i32_0 = arith.constant 0 : i32
    %c0_i32_1 = arith.constant 0 : i32
    %c0_i32_2 = arith.constant 0 : i32
    return %arg0, %c0_i32, %c0_i32_0, %c0_i32_1 : i32, i32, i32, i32
  }
}

</mosaic_0001>

<llo_original>
// kernel: tpu_custom_call.1
$region0: #{tpu_custom_call.1}
  #allocation0 [shape = 'u32[]', space=smem, size = 0x4, offset = 0x4, fixed_abs, tag = 'smem constant byte address 0x4 - core index']
  #allocation1 [shape = 'u32[144,128]{1,0:T(1,128)}', space=vmem, size = 0x12000, scoped, tag = 'internal scratch']
  %s0 = inlined_call_operand.hbm [shape: f32[2,8,128], index: 0, kind: input, shape index: {}]
  %s1 = inlined_call_operand.hbm [shape: f32[2,8,128], index: 1, kind: input, shape index: {}]
  %s2 = inlined_call_operand.hbm [shape: f32[2,8,128], index: 2, kind: input, shape index: {}]
  %s3 = inlined_call_operand.hbm [shape: f32[2,4,8,128], index: 3, kind: output, shape index: {}]
  %s4 = sld [smem:[#allocation0]]
  $region61: #{tpu_custom_call.1} parent=0
    _
  %s6 = ssub.s32 1, %s4
  %s7 = scalar_select 0, %s6, %s4
  $region1: #{tpu_custom_call.1} parent=0
    #allocation2 [shape = 'u8[8192]{0}', space=vmem, size = 0x2000, scoped, tag = 'input window, operand 0']
    #allocation3 [shape = 's32[2]{0}', space=sflag, size = 0x8, scoped, tag = 'scoped memory for tpu_custom_call.1']
    #allocation4 [shape = 's32[2]{0}', space=sflag, size = 0x8, scoped, tag = 'scoped memory for tpu_custom_call.1']
    #allocation5 [shape = 'u8[8192]{0}', space=vmem, size = 0x2000, scoped, tag = 'input window, operand 1']
    #allocation6 [shape = 's32[2]{0}', space=sflag, size = 0x8, scoped, tag = 'scoped memory for tpu_custom_call.1']
    #allocation7 [shape = 'u8[8192]{0}', space=vmem, size = 0x2000, scoped, tag = 'input window, operand 2']
    #allocation8 [shape = 'u8[32768]{0}', space=vmem, size = 0x8000, scoped, tag = 'output window, operand 0']
    %8 = vsyncpa [#allocation3], 0
    %s9 = scalar_lea.sflag [#allocation3], 1
    %10 = vsyncpa %s9, 0
    %11 = vsyncpa [#allocation6], 0
    %s12 = scalar_lea.sflag [#allocation6], 1
    %13 = vsyncpa %s12, 0
    %14 = vsyncpa [#allocation4], 0
    %s15 = scalar_lea.sflag [#allocation4], 1
    %16 = vsyncpa %s15, 0
    loop: start=0, step=1, limit=4
    $region2: #{tpu_custom_call.1} parent=1 // loop_pre_header
      _
    $region3: #{tpu_custom_call.1} parent=1 // loop_header
      %s18 = sphi 0, %s22
      %p19 = scmp.ge.s32.totalorder %s18, 4
      %s25 = sphi 0, %s37
      %s26 = sphi 0, %s33
      %s27 = sphi 0, %s25
      %s28 = sphi 0, %s26
      %s29 = sphi 0, %s27
      %s30 = sphi 0, %s28
      %s42 = sphi 0, %s44
      %s45 = sphi 0, %s42
      %s46 = sphi 0, %s45
      %s62 = sphi 0, %s46
      %s70 = sphi 0, %s72
      %s73 = sphi 0, %s70
      %s74 = sphi 0, %s73
      %s90 = sphi 0, %s74
      %s98 = sphi 0, %s100
      %s101 = sphi 0, %s98
      %s102 = sphi 0, %s101
      %s118 = sphi 0, %s102
      %s124 = sphi 0, %s126
      %s127 = sphi 0, %s124
      %s128 = sphi 0, %s127
      %s144 = sphi 0, %s128
    $region4: #{tpu_custom_call.1} parent=1 // loop_header_branch
      %21 = sbr.rel (%p19) target = $region8
    $region5: #{tpu_custom_call.1} parent=1 // loop_body
      %s23 = ssub.s32 %s18, 1
      %s24 = ssub.s32 %s18, 2
      %s31 = sadd.s32 1, %s26
      %p32 = scmp.ge.s32.totalorder %s31, 1
      %s33 = scalar_select %p32, 0, %s31
      %s34 = sadd.s32 1, %s25
      %s35 = scalar_select %p32, %s34, %s25
      %p36 = scmp.ge.s32.totalorder %s35, 2
      %s37 = scalar_select %p36, 0, %s35
      %s38 = ssub.s32 %s25, %s37
      %s39 = ssub.s32 %s26, %s33
      %s40 = sor.u32 %s38, %s39
      %p41 = scmp.eq.s32.totalorder %s40, 0
      %s43 = sadd.s32 %s42, 1
      %s44 = scalar_select %p41, %s42, %s43
      %p47 = pneg %p41
      %p48 = scmp.eq.s32.totalorder %s18, 1
      %p49 = por %p47, %p48
      %p50 = scmp.ne.s32.totalorder %s42, %s45
      %p51 = scmp.eq.s32.totalorder %s18, 0
      %p52 = por %p50, %p51
      %p53 = scmp.ne.s32.totalorder %s42, %s45
      %p54 = scmp.eq.s32.totalorder %s23, 1
      %p55 = por %p53, %p54
      %p56 = scmp.ne.s32.totalorder %s45, %s46
      %p57 = scmp.eq.s32.totalorder %s23, 0
      %p58 = por %p56, %p57
      %p59 = scmp.ne.s32.totalorder %s45, %s46
      %p60 = scmp.eq.s32.totalorder %s24, 1
      %p61 = por %p59, %p60
      %p63 = scmp.ne.s32.totalorder %s46, %s62
      %p64 = scmp.eq.s32.totalorder %s24, 0
      %p65 = por %p63, %p64
      %s66 = ssub.s32 %s25, %s37
      %s67 = ssub.s32 %s26, %s33
      %s68 = sor.u32 %s66, %s67
      %p69 = scmp.eq.s32.totalorder %s68, 0
      %s71 = sadd.s32 %s70, 1
      %s72 = scalar_select %p69, %s70, %s71
      %p75 = pneg %p69
      %p76 = scmp.eq.s32.totalorder %s18, 1
      %p77 = por %p75, %p76
      %p78 = scmp.ne.s32.totalorder %s70, %s73
      %p79 = scmp.eq.s32.totalorder %s18, 0
      %p80 = por %p78, %p79
      %p81 = scmp.ne.s32.totalorder %s70, %s73
      %p82 = scmp.eq.s32.totalorder %s23, 1
      %p83 = por %p81, %p82
      %p84 = scmp.ne.s32.totalorder %s73, %s74
      %p85 = scmp.eq.s32.totalorder %s23, 0
      %p86 = por %p84, %p85
      %p87 = scmp.ne.s32.totalorder %s73, %s74
      %p88 = scmp.eq.s32.totalorder %s24, 1
      %p89 = por %p87, %p88
      %p91 = scmp.ne.s32.totalorder %s74, %s90
      %p92 = scmp.eq.s32.totalorder %s24, 0
      %p93 = por %p91, %p92
      %s94 = ssub.s32 %s25, %s37
      %s95 = ssub.s32 %s26, %s33
      %s96 = sor.u32 %s94, %s95
      %p97 = scmp.eq.s32.totalorder %s96, 0
      %s99 = sadd.s32 %s98, 1
      %s100 = scalar_select %p97, %s98, %s99
      %p103 = pneg %p97
      %p104 = scmp.eq.s32.totalorder %s18, 1
      %p105 = por %p103, %p104
      %p106 = scmp.ne.s32.totalorder %s98, %s101
      %p107 = scmp.eq.s32.totalorder %s18, 0
      %p108 = por %p106, %p107
      %p109 = scmp.ne.s32.totalorder %s98, %s101
      %p110 = scmp.eq.s32.totalorder %s23, 1
      %p111 = por %p109, %p110
      %p112 = scmp.ne.s32.totalorder %s101, %s102
      %p113 = scmp.eq.s32.totalorder %s23, 0
      %p114 = por %p112, %p113
      %p115 = scmp.ne.s32.totalorder %s101, %s102
      %p116 = scmp.eq.s32.totalorder %s24, 1
      %p117 = por %p115, %p116
      %p119 = scmp.ne.s32.totalorder %s102, %s118
      %p120 = scmp.eq.s32.totalorder %s24, 0
      %p121 = por %p119, %p120
      %s122 = ssub.s32 %s25, %s37
      %p123 = scmp.eq.s32.totalorder %s122, 0
      %s125 = sadd.s32 %s124, 1
      %s126 = scalar_select %p123, %s124, %s125
      %p129 = pneg %p123
      %p130 = scmp.eq.s32.totalorder %s18, 1
      %p131 = por %p129, %p130
      %p132 = scmp.ne.s32.totalorder %s124, %s127
      %p133 = scmp.eq.s32.totalorder %s18, 0
      %p134 = por %p132, %p133
      %p135 = scmp.ne.s32.totalorder %s124, %s127
      %p136 = scmp.eq.s32.totalorder %s23, 1
      %p137 = por %p135, %p136
      %p138 = scmp.ne.s32.totalorder %s127, %s128
      %p139 = scmp.eq.s32.totalorder %s23, 0
      %p140 = por %p138, %p139
      %p141 = scmp.ne.s32.totalorder %s127, %s128
      %p142 = scmp.eq.s32.totalorder %s24, 1
      %p143 = por %p141, %p142
      %p145 = scmp.ne.s32.totalorder %s128, %s144
      %p146 = scmp.eq.s32.totalorder %s24, 0
      %p147 = por %p145, %p146
      %p148 = scmp.le.s32.totalorder 1, %s18
      %p149 = scmp.lt.s32.totalorder %s18, 3
      %p150 = pnand %p148, %p149
      %p151 = pneg %p150
      // Predicated region
      $region9: #{tpu_custom_call.1} parent=5 // pred_check
        _
      $region10: #{tpu_custom_call.1} parent=5 // pred_check_branch
        %153 = sbr.rel (%p150) target = $region12
      $region11: #{tpu_custom_call.1} parent=5 // pred_region
        %s154 = ssub.s32 %s18, 1
      $region12: #{tpu_custom_call.1} parent=5 // pred_fallthru
        _
      %p155 = scmp.lt.s32.totalorder %s18, 2
      // Predicated region
      $region13: #{tpu_custom_call.1} parent=5 // pred_check
        %p156 = pneg %p155
      $region14: #{tpu_custom_call.1} parent=5 // pred_check_branch
        %158 = sbr.rel (%p156) target = $region16
      $region15: #{tpu_custom_call.1} parent=5 // pred_region
        // Predicated region
        $region17: #{tpu_custom_call.1} parent=15 // pred_check
          %p159 = pneg %p52
        $region18: #{tpu_custom_call.1} parent=15 // pred_check_branch
          %161 = sbr.rel (%p159) target = $region20
        $region19: #{tpu_custom_call.1} parent=15 // pred_region
          %s162 = sand.u32 %s42, 1
          %s163 = scalar_lea.sflag [#allocation3], %s162
          %s164 = sand.u32 %s42, 1
          %s165 = smul.addr %s164, 8
          %s166 = scalar_lea.vmem [#allocation2], %s165
          %s168 = ssub.s32 128, 128
          %169 = vsyncadd %s163, %s168
          %s170 = sadd.s32 %s26, %s25
          %s171 = smul.addr %s170, 128
          %s172 = scalar_lea.hbm %s0, %s171
          %s174 = sshll.u32 %s166, 4
          %s175 = int_to_ptr.vmem [resolvable:$true] %s174
          %177 = dma.hbm_to_vmem [thread:$0]  %s172, 128, %s175, %s163
        $region20: #{tpu_custom_call.1} parent=15 // pred_fallthru
          _
        // Predicated region
        $region21: #{tpu_custom_call.1} parent=15 // pred_check
          %p178 = pneg %p80
        $region22: #{tpu_custom_call.1} parent=15 // pred_check_branch
          %180 = sbr.rel (%p178) target = $region24
        $region23: #{tpu_custom_call.1} parent=15 // pred_region
          %s181 = sand.u32 %s18, 1
          %s182 = scalar_lea.sflag [#allocation6], %s181
          %s183 = sand.u32 %s70, 1
          %s184 = smul.addr %s183, 8
          %s185 = scalar_lea.vmem [#allocation5], %s184
          %s187 = ssub.s32 128, 128
          %188 = vsyncadd %s182, %s187
          %s189 = sadd.s32 %s26, %s25
          %s190 = smul.addr %s189, 128
          %s191 = scalar_lea.hbm %s1, %s190
          %s193 = sshll.u32 %s185, 4
          %s194 = int_to_ptr.vmem [resolvable:$true] %s193
          %196 = dma.hbm_to_vmem [thread:$0]  %s191, 128, %s194, %s182
        $region24: #{tpu_custom_call.1} parent=15 // pred_fallthru
          _
        // Predicated region
        $region25: #{tpu_custom_call.1} parent=15 // pred_check
          %p197 = pneg %p108
        $region26: #{tpu_custom_call.1} parent=15 // pred_check_branch
          %199 = sbr.rel (%p197) target = $region28
        $region27: #{tpu_custom_call.1} parent=15 // pred_region
          %s200 = sand.u32 %s18, 1
          %s201 = scalar_lea.sflag [#allocation6], %s200
          %s202 = sand.u32 %s98, 1
          %s203 = smul.addr %s202, 8
          %s204 = scalar_lea.vmem [#allocation7], %s203
          %s206 = ssub.s32 128, 128
          %207 = vsyncadd %s201, %s206
          %s208 = sadd.s32 %s26, %s25
          %s209 = smul.addr %s208, 128
          %s210 = scalar_lea.hbm %s2, %s209
          %s212 = sshll.u32 %s204, 4
          %s213 = int_to_ptr.vmem [resolvable:$true] %s212
          %215 = dma.hbm_to_vmem [thread:$0]  %s210, 128, %s213, %s201
        $region28: #{tpu_custom_call.1} parent=15 // pred_fallthru
          _
      $region16: #{tpu_custom_call.1} parent=5 // pred_fallthru
        _
      %p216 = scmp.le.s32.totalorder 1, %s18
      %p217 = scmp.lt.s32.totalorder %s18, 3
      %p218 = pnand %p216, %p217
      %p219 = pneg %p218
      // Predicated region
      $region29: #{tpu_custom_call.1} parent=5 // pred_check
        _
      $region30: #{tpu_custom_call.1} parent=5 // pred_check_branch
        %221 = sbr.rel (%p218) target = $region32
      $region31: #{tpu_custom_call.1} parent=5 // pred_region
        %s222 = ssub.s32 %s18, 1
        %s223 = sand.u32 %s45, 1
        %s224 = scalar_lea.sflag [#allocation3], %s223
        %s225 = sand.u32 %s45, 1
        %s226 = smul.addr %s225, 8
        %s227 = scalar_lea.vmem [#allocation2], %s226
        // Predicated region
        $region33: #{tpu_custom_call.1} parent=31 // pred_check
          %p228 = pneg %p58
        $region34: #{tpu_custom_call.1} parent=31 // pred_check_branch
          %230 = sbr.rel (%p228) target = $region36
        $region35: #{tpu_custom_call.1} parent=31 // pred_region
          %231 = dma.done %s224, 128
        $region36: #{tpu_custom_call.1} parent=31 // pred_fallthru
          _
        %s232 = sand.u32 %s23, 1
        %s233 = scalar_lea.sflag [#allocation6], %s232
        %s234 = sand.u32 %s73, 1
        %s235 = smul.addr %s234, 8
        %s236 = scalar_lea.vmem [#allocation5], %s235
        // Predicated region
        $region37: #{tpu_custom_call.1} parent=31 // pred_check
          %p237 = pneg %p86
        $region38: #{tpu_custom_call.1} parent=31 // pred_check_branch
          %239 = sbr.rel (%p237) target = $region40
        $region39: #{tpu_custom_call.1} parent=31 // pred_region
          %240 = dma.done %s233, 128
        $region40: #{tpu_custom_call.1} parent=31 // pred_fallthru
          _
        %s241 = sand.u32 %s23, 1
        %s242 = scalar_lea.sflag [#allocation6], %s241
        %s243 = sand.u32 %s101, 1
        %s244 = smul.addr %s243, 8
        %s245 = scalar_lea.vmem [#allocation7], %s244
        // Predicated region
        $region41: #{tpu_custom_call.1} parent=31 // pred_check
          %p246 = pneg %p114
        $region42: #{tpu_custom_call.1} parent=31 // pred_check_branch
          %248 = sbr.rel (%p246) target = $region44
        $region43: #{tpu_custom_call.1} parent=31 // pred_region
          %249 = dma.done %s242, 128
        $region44: #{tpu_custom_call.1} parent=31 // pred_fallthru
          _
        %s250 = sand.u32 %s45, 1
        %s251 = scalar_lea.sflag [#allocation3], %s250
        %s252 = sand.u32 %s45, 1
        %s253 = smul.addr %s252, 8
        %s254 = scalar_lea.vmem [#allocation2], %s253
        %p255 = pneg %p58
        %p256 = pneg %p55
        %s257 = sand.u32 %s23, 1
        %s258 = scalar_lea.sflag [#allocation6], %s257
        %s259 = sand.u32 %s73, 1
        %s260 = smul.addr %s259, 8
        %s261 = scalar_lea.vmem [#allocation5], %s260
        %p262 = pneg %p86
        %p263 = pneg %p83
        %s264 = sand.u32 %s23, 1
        %s265 = scalar_lea.sflag [#allocation6], %s264
        %s266 = sand.u32 %s101, 1
        %s267 = smul.addr %s266, 8
        %s268 = scalar_lea.vmem [#allocation7], %s267
        %p269 = pneg %p114
        %p270 = pneg %p111
        %p271 = pneg %p140
        %p272 = pneg %p137
        %s273 = sand.u32 %s127, 1
        %s274 = scalar_lea.sflag [#allocation4], %s273
        %s275 = sand.u32 %s127, 1
        %s276 = smul.addr %s275, 32
        %s277 = scalar_lea.vmem [#allocation8], %s276
        %p278 = scmp.eq.s32.totalorder %s28, 0
        // Predicated region
        $region45: #{tpu_custom_call.1} parent=31 // pred_check
          %p279 = pneg %p278
        $region46: #{tpu_custom_call.1} parent=31 // pred_check_branch
          %281 = sbr.rel (%p279) target = $region48
        $region47: #{tpu_custom_call.1} parent=31 // pred_region
          %282 = vst [vmem:[%s277] sm:$0xff] 0.0
          %283 = vst [vmem:[%s277 + $0x8] sm:$0xff] 0.0
          %284 = vst [vmem:[%s277 + $0x10] sm:$0xff] 0.0
          %285 = vst [vmem:[%s277 + $0x18] sm:$0xff] 0.0
        $region48: #{tpu_custom_call.1} parent=31 // pred_fallthru
          _
        %v286 = vld [vmem:[%s227] sm:$0xff]
        %v287 = vld [vmem:[%s236] sm:$0xff]
        %v288 = vld [vmem:[%s245] sm:$0xff]
        %v289 = vand.u32 2147483647, %v286
        %v290 = vsub.f32 0.0, %v289
        %v291 = vmul.f32 %v290, 1.442695
        %v292 = vpow.pop %v291
        %v293 = vadd.f32 %v292, 1.0
        %v294 = vlog2.pop %v293
        %v295 = vmul.f32 %v294, 0.6931472
        %v296 = vmin.f32 %v286, 0.0
        %v297 = vsub.f32 %v296, %v295
        %v298 = vsub.f32 0.0, %v286
        %v299 = vmin.f32 %v298, 0.0
        %v300 = vsub.f32 %v299, %v295
        %v301 = vmul.f32 %v297, 1.442695
        %v302 = vpow.pop %v301
        %v303 = vmax.f32 %v297, -100.0
        %v304 = vmul.f32 %v287, %v303
        %v305 = vsub.f32 1.0, %v287
        %v306 = vmax.f32 %v300, -100.0
        %v307 = vmul.f32 %v305, %v306
        %v308 = vadd.f32 %v304, %v307
        %v309 = vsub.f32 0.0, %v308
        %v310 = vld [vmem:[%s277] sm:$0xff]
        %v311 = vmul.f32 %v302, %v287
        %v312 = vadd.f32 %v311, 0.0
        %v313 = vadd.f32 %v310, %v312
        %314 = vst [vmem:[%s277] sm:$0xff] %v313
        %s315 = scalar_lea.vmem %s277, 8 [#allocation8]
        %v316 = vld [vmem:[%s315] sm:$0xff]
        %v317 = vadd.f32 %v302, 0.0
        %v318 = vadd.f32 %v316, %v317
        %319 = vst [vmem:[%s315] sm:$0xff] %v318
        %s320 = scalar_lea.vmem %s277, 16 [#allocation8]
        %v321 = vld [vmem:[%s320] sm:$0xff]
        %v322 = vadd.f32 %v287, 0.0
        %v323 = vadd.f32 %v321, %v322
        %324 = vst [vmem:[%s320] sm:$0xff] %v323
        %s325 = scalar_lea.vmem %s277, 24 [#allocation8]
        %v326 = vld [vmem:[%s325] sm:$0xff]
        %v327 = vadd.f32 %v288, 1.0
        %v328 = vmul.f32 %v327, %v309
        %v329 = vadd.f32 %v328, 0.0
        %v330 = vadd.f32 %v326, %v329
        %331 = vst [vmem:[%s325] sm:$0xff] %v330
        %s332 = sand.u32 %s127, 1
        %s333 = scalar_lea.sflag [#allocation4], %s332
        %s334 = sand.u32 %s127, 1
        %s335 = smul.addr %s334, 32
        %s336 = scalar_lea.vmem [#allocation8], %s335
        // Predicated region
        $region49: #{tpu_custom_call.1} parent=31 // pred_check
          %p337 = pneg %p137
        $region50: #{tpu_custom_call.1} parent=31 // pred_check_branch
          %339 = sbr.rel (%p337) target = $region52
        $region51: #{tpu_custom_call.1} parent=31 // pred_region
          %s341 = ssub.s32 512, 512
          %342 = vsyncadd %s333, %s341
          %s343 = smul.addr %s27, 4
          %s344 = smul.addr %s343, 128
          %s345 = scalar_lea.hbm %s3, %s344
          %s346 = sshll.u32 %s336, 4
          %s347 = int_to_ptr.vmem [resolvable:$true] %s346
          %352 = dma.vmem_to_hbm [thread:$0]  %s347, 512, %s345, %s333, 128, 128, 8
        $region52: #{tpu_custom_call.1} parent=31 // pred_fallthru
          _
      $region32: #{tpu_custom_call.1} parent=5 // pred_fallthru
        _
      %p353 = scmp.le.s32.totalorder 2, %s18
      // Predicated region
      $region53: #{tpu_custom_call.1} parent=5 // pred_check
        %p354 = pneg %p353
      $region54: #{tpu_custom_call.1} parent=5 // pred_check_branch
        %356 = sbr.rel (%p354) target = $region56
      $region55: #{tpu_custom_call.1} parent=5 // pred_region
        %s357 = ssub.s32 %s18, 2
        // Predicated region
        $region57: #{tpu_custom_call.1} parent=55 // pred_check
          %p358 = pneg %p143
        $region58: #{tpu_custom_call.1} parent=55 // pred_check_branch
          %360 = sbr.rel (%p358) target = $region60
        $region59: #{tpu_custom_call.1} parent=55 // pred_region
          %s361 = sand.u32 %s128, 1
          %s362 = scalar_lea.sflag [#allocation4], %s361
          %s363 = sand.u32 %s128, 1
          %s364 = smul.addr %s363, 32
          %s365 = scalar_lea.vmem [#allocation8], %s364
          %366 = dma.done %s362, 512
        $region60: #{tpu_custom_call.1} parent=55 // pred_fallthru
          _
      $region56: #{tpu_custom_call.1} parent=5 // pred_fallthru
        _
    $region6: #{tpu_custom_call.1} parent=1 // loop_footer
      %s22 = sadd.s32 1, %s18
    $region7: #{tpu_custom_call.1} parent=1 // loop_footer_branch
      %17 = sbr.rel target = $region3
    $region8: #{tpu_custom_call.1} parent=1 // loop_exit
      _
    %367 = vsyncpa [#allocation3], 1
    %s368 = scalar_lea.sflag [#allocation3], 1
    %369 = vsyncpa %s368, 1
    %370 = vsyncpa [#allocation6], 1
    %s371 = scalar_lea.sflag [#allocation6], 1
    %372 = vsyncpa %s371, 1
    %373 = vsyncpa [#allocation4], 1
    %s374 = scalar_lea.sflag [#allocation4], 1
    %375 = vsyncpa %s374, 1

</llo_original>
